<compile_context>
chip_gen: v6e
topology: v6e:2x2x1
jax: 0.10.0
libtpu: 0.0.40
codegen_flags: <defaults>
</compile_context>

<pallas_src>
import jax
import jax.numpy as jnp
from jax.experimental import pallas as pl
from jax.experimental.pallas import tpu as pltpu


# ---------------------------------------------------------------------------
# Kernel 1: one-time weight collapse (runs once, at parameter-pack time).
#   encoder: hidden = last * w_enc[:,0] + b_enc
#   decoder: out    = dot(hidden, w_dec[0,:]) + b_dec
#   =>       out    = last * A + B
# ---------------------------------------------------------------------------
def _collapse_kernel(bdec_ref, packed_ref, affine_ref):
    # bdec_ref:   SMEM (1,)    -> decoder bias
    # packed_ref: VMEM (3, H)  -> rows [w_enc, b_enc, w_dec] (one padded tile, one DMA)
    # affine_ref: SMEM (2,)    -> [A, B]
    w = packed_ref[...]                                   # (3, H): single vreg for H <= 128
    a = jnp.sum(w[0:1, :] * w[2:3, :])                    # VPU mul + XLU reduce -> scalar
    b = jnp.sum(w[1:2, :] * w[2:3, :])
    affine_ref[0] = a
    affine_ref[1] = b + bdec_ref[0]


@jax.jit
def _collapse_params(w_enc, b_enc, w_dec, b_dec):
    """One-time: pack weights and collapse the two Linears into (A, B)."""
    H = w_enc.shape[0]
    packed = jnp.concatenate(
        [w_enc.reshape(1, H), b_enc.reshape(1, H), w_dec.reshape(1, H)], axis=0
    ).astype(jnp.float32)
    bdec = b_dec.reshape((1,)).astype(jnp.float32)
    return pl.pallas_call(
        _collapse_kernel,
        out_shape=jax.ShapeDtypeStruct((2,), jnp.float32),
        in_specs=[
            pl.BlockSpec(memory_space=pltpu.SMEM),   # b_dec scalar
            pl.BlockSpec(memory_space=pltpu.VMEM),   # packed (3, H) weights
        ],
        out_specs=pl.BlockSpec(memory_space=pltpu.SMEM),
    )(bdec, packed)


# ---------------------------------------------------------------------------
# Kernel 2: per-call forward — one scalar FMA, everything in SMEM.
# ---------------------------------------------------------------------------
def _fma_kernel(last_ref, affine_ref, out_ref):
    # last_ref:   SMEM (1,)  -> last prefix coefficient
    # affine_ref: SMEM (2,)  -> [A, B]
    # out_ref:    SMEM (1,)  -> scalar output
    out_ref[0] = last_ref[0] * affine_ref[0] + affine_ref[1]


@jax.jit
def _forward_last(last, affine):
    out = pl.pallas_call(
        _fma_kernel,
        out_shape=jax.ShapeDtypeStruct((1,), jnp.float32),
        in_specs=[
            pl.BlockSpec(memory_space=pltpu.SMEM),
            pl.BlockSpec(memory_space=pltpu.SMEM),
        ],
        out_specs=pl.BlockSpec(memory_space=pltpu.SMEM),
    )(last, affine)
    return out[0]


# ---------------------------------------------------------------------------
# Kernel 3 (optional amortized path): batched "last" values, lane-dense output.
# For very large batches add a grid over lane tiles and mark it "parallel" so
# v7x shards across its 2 TensorCores; a single block is enough for this demo.
# ---------------------------------------------------------------------------
def _batched_kernel(affine_ref, lasts_ref, out_ref):
    # affine_ref: SMEM (2,); lasts_ref/out_ref: VMEM (1, B_pad), lane-dense
    out_ref[...] = lasts_ref[...] * affine_ref[0] + affine_ref[1]


@jax.jit
def _forward_batched(lasts_2d, affine):
    return pl.pallas_call(
        _batched_kernel,
        out_shape=jax.ShapeDtypeStruct(lasts_2d.shape, jnp.float32),
        in_specs=[
            pl.BlockSpec(memory_space=pltpu.SMEM),
            pl.BlockSpec(memory_space=pltpu.VMEM),
        ],
        out_specs=pl.BlockSpec(memory_space=pltpu.VMEM),
    )(affine, lasts_2d)


class MinimalRNNPallas:
    """Holds pre-collapsed parameters; per-call work is a single SMEM FMA kernel."""

    def __init__(self, w_enc, b_enc, w_dec, b_dec):
        # w_enc: [H, 1], b_enc: [H], w_dec: [1, H], b_dec: [1]  (PyTorch nn.Linear shapes)
        self.hidden_size = w_enc.shape[0]
        self.param_dtype = w_enc.dtype
        self.b_dec = jnp.squeeze(jnp.asarray(b_dec))               # for the empty branch
        self.affine = jax.block_until_ready(
            _collapse_params(w_enc, b_enc, w_dec, b_dec))          # one-time Pallas kernel

    def __call__(self, prefix):
        out_dtype = jnp.result_type(prefix.dtype, self.param_dtype)
        if prefix.size == 0:
            # hidden = zeros(H) -> decoder(zeros) = b_dec  (static-shape branch, no launch)
            return self.b_dec.astype(out_dtype)
        # Eager fixed-shape slice: jitted hot path never retraces across seq lengths.
        last = prefix[-1:].astype(jnp.float32)
        return _forward_last(last, self.affine).astype(out_dtype)

    def forward_batched(self, lasts):
        """Amortized path: one launch for many 'last' coefficients (lane-dense)."""
        lasts = jnp.asarray(lasts)
        B = lasts.shape[0]
        B_pad = ((B + 127) // 128) * 128
        lasts_2d = jnp.zeros((1, B_pad), jnp.float32).at[0, :B].set(
            lasts.astype(jnp.float32))
        out = _forward_batched(lasts_2d, self.affine)
        return out[0, :B].astype(jnp.result_type(lasts.dtype, self.param_dtype))


def _reference_forward(prefix, w_enc, b_enc, w_dec, b_dec):
    """Pure-JAX reference mirroring the PyTorch module."""
    H = w_enc.shape[0]
    if prefix.size == 0:
        hidden = jnp.zeros((H,), dtype=w_enc.dtype)
    else:
        last = prefix[-1:].reshape(1, 1)
        hidden = (last @ w_enc.T + b_enc).reshape(H)
    out = hidden @ w_dec.reshape(H) + b_dec[0]
    return jnp.squeeze(out)


if __name__ == "__main__":
    hidden_size = 32
    seq = 8

    key = jax.random.PRNGKey(0)
    k1, k2, k3, k4, k5, k6 = jax.random.split(key, 6)

    # Deterministic parameter init (nn.Linear shapes).
    w_enc = jax.random.normal(k1, (hidden_size, 1), dtype=jnp.float32) * 0.1  # encoder.weight
    b_enc = jax.random.normal(k2, (hidden_size,), dtype=jnp.float32) * 0.1    # encoder.bias
    w_dec = jax.random.normal(k3, (1, hidden_size), dtype=jnp.float32) * 0.1  # decoder.weight
    b_dec = jax.random.normal(k4, (1,), dtype=jnp.float32) * 0.1              # decoder.bias

    prefix = jax.random.normal(k5, (seq,), dtype=jnp.float32)

    model = MinimalRNNPallas(w_enc, b_enc, w_dec, b_dec)

    # Main path.
    out = jax.block_until_ready(model(prefix))
    ref = _reference_forward(prefix, w_enc, b_enc, w_dec, b_dec)
    assert out.shape == ()                       # scalar, like output.squeeze()
    assert jnp.allclose(out, ref, atol=1e-5, rtol=1e-5), (out, ref)

    # A second call with a different seq length must not change results (and does not retrace
    # the jitted hot path, since it only ever sees a fixed (1,) input).
    prefix2 = jnp.concatenate([prefix, prefix[:3]])
    out2 = jax.block_until_ready(model(prefix2))
    ref2 = _reference_forward(prefix2, w_enc, b_enc, w_dec, b_dec)
    assert jnp.allclose(out2, ref2, atol=1e-5, rtol=1e-5), (out2, ref2)

    # Empty-prefix branch (prefix.numel() == 0).
    empty_prefix = jnp.zeros((0,), jnp.float32)
    empty_out = jax.block_until_ready(model(empty_prefix))
    empty_ref = _reference_forward(empty_prefix, w_enc, b_enc, w_dec, b_dec)
    assert jnp.allclose(empty_out, empty_ref, atol=1e-6), (empty_out, empty_ref)

    # Amortized batched path: many 'last' coefficients in one launch.
    lasts = jax.random.normal(k6, (5,), dtype=jnp.float32)
    bouts = jax.block_until_ready(model.forward_batched(lasts))
    brefs = jnp.stack([
        _reference_forward(lasts[i:i + 1], w_enc, b_enc, w_dec, b_dec) for i in range(5)
    ])
    assert jnp.allclose(bouts, brefs, atol=1e-5, rtol=1e-5), (bouts, brefs)

    print("KERNEL_OK")
</pallas_src>

<mosaic_0001>
module attributes {stable_mosaic.version = 11 : i64} {
  func.func @_collapse_kernel(%arg0: memref<1xf32, #tpu.memory_space<smem>>, %arg1: memref<3x32xf32, #tpu.memory_space<vmem>>, %arg2: memref<2xf32, #tpu.memory_space<smem>>) attributes {dimension_semantics = [], scalar_prefetch = 0 : i64, scratch_operands = 0 : i64, tpu.core_type = #tpu.core_type<tc>} {
    %c0 = arith.constant 0 : index
    %c0_0 = arith.constant 0 : index
    %0 = vector.load %arg1[%c0, %c0_0] : memref<3x32xf32, #tpu.memory_space<vmem>>, vector<3x32xf32>
    %1 = vector.extract_strided_slice %0 {offsets = [0, 0], sizes = [1, 32], strides = [1, 1]} : vector<3x32xf32> to vector<1x32xf32>
    %2 = vector.extract_strided_slice %0 {offsets = [2, 0], sizes = [1, 32], strides = [1, 1]} : vector<3x32xf32> to vector<1x32xf32>
    %3 = arith.mulf %1, %2 : vector<1x32xf32>
    %4 = vector.shape_cast %3 : vector<1x32xf32> to vector<1x1x32xf32>
    %cst = arith.constant dense<0.000000e+00> : vector<1xf32>
    %5 = vector.multi_reduction <add>, %4, %cst [1, 2] : vector<1x1x32xf32> to vector<1xf32>
    %6 = vector.shape_cast %5 : vector<1xf32> to vector<1x1x1xf32>
    %7 = vector.extract %6[0, 0, 0] : f32 from vector<1x1x1xf32>
    %8 = vector.extract_strided_slice %0 {offsets = [1, 0], sizes = [1, 32], strides = [1, 1]} : vector<3x32xf32> to vector<1x32xf32>
    %9 = vector.extract_strided_slice %0 {offsets = [2, 0], sizes = [1, 32], strides = [1, 1]} : vector<3x32xf32> to vector<1x32xf32>
    %10 = arith.mulf %8, %9 : vector<1x32xf32>
    %11 = vector.shape_cast %10 : vector<1x32xf32> to vector<1x1x32xf32>
    %cst_1 = arith.constant dense<0.000000e+00> : vector<1xf32>
    %12 = vector.multi_reduction <add>, %11, %cst_1 [1, 2] : vector<1x1x32xf32> to vector<1xf32>
    %13 = vector.shape_cast %12 : vector<1xf32> to vector<1x1x1xf32>
    %14 = vector.extract %13[0, 0, 0] : f32 from vector<1x1x1xf32>
    %c0_2 = arith.constant 0 : index
    %15 = memref.load %arg2[%c0_2] : memref<2xf32, #tpu.memory_space<smem>>
    memref.store %7, %arg2[%c0_2] : memref<2xf32, #tpu.memory_space<smem>>
    %c0_3 = arith.constant 0 : index
    %16 = memref.load %arg0[%c0_3] : memref<1xf32, #tpu.memory_space<smem>>
    %17 = arith.addf %14, %16 : f32
    %c1 = arith.constant 1 : index
    %18 = memref.load %arg2[%c1] : memref<2xf32, #tpu.memory_space<smem>>
    memref.store %17, %arg2[%c1] : memref<2xf32, #tpu.memory_space<smem>>
    return
  }
}

</mosaic_0001>

<llo_original>
// kernel: _collapse_params.1
$region0: #{_collapse_params.1}
  #allocation0 [shape = 'u32[]', space=smem, size = 0x4, offset = 0x4, fixed_abs, tag = 'smem constant byte address 0x4 - core index']
  #allocation1 [shape = 'u32[144,128]{1,0:T(1,128)}', space=vmem, size = 0x12000, scoped, tag = 'internal scratch']
  #allocation2 [shape = 'f32[1]{0:T(128)S(6)}', space=smem, size = 0x200, scoped, tag = 'scoped memory for _collapse_params.1']
  %s0 = inlined_call_operand.<no memory space> [shape: f32[1], index: 0, kind: input, shape index: {}]
  %s1 = inlined_call_operand.vmem [shape: f32[3,32], index: 1, kind: input, shape index: {}]
  %s2 = inlined_call_operand.hbm [shape: f32[2], index: 2, kind: output, shape index: {}]
  %s3 = sld [smem:[#allocation0]]
  $region18: #{_collapse_params.1} parent=0
    _
  %s5 = ssub.s32 1, %s3
  %s6 = scalar_select 0, %s5, %s3
  %7 = sst [smem:[#allocation2]] %s0
  $region1: #{_collapse_params.1} parent=0
    #allocation3 [shape = 'u8[512]{0}', space=smem, size = 0x200, scoped, tag = 'output window, operand 0, single buffered']
    #allocation4 [shape = 's32[1]{0}', space=sflag, size = 0x4, scoped, tag = 'scoped memory for _collapse_params.1']
    %8 = vsyncpa [#allocation4], 0
    // Predicated region
    $region2: #{_collapse_params.1} parent=1 // pred_check
      _
    $region3: #{_collapse_params.1} parent=1 // pred_check_branch
      %10 = sbr.rel (0) target = $region5
    $region4: #{_collapse_params.1} parent=1 // pred_region
      _
    $region5: #{_collapse_params.1} parent=1 // pred_fallthru
      _
    // Predicated region
    $region6: #{_collapse_params.1} parent=1 // pred_check
      _
    $region7: #{_collapse_params.1} parent=1 // pred_check_branch
      %12 = sbr.rel (0) target = $region9
    $region8: #{_collapse_params.1} parent=1 // pred_region
      _
    $region9: #{_collapse_params.1} parent=1 // pred_fallthru
      _
    %v13 = vld [vmem:[%s1] sm:$0x7]
    %v15 = vrot.slane %v13, 2
    %v17 = vmul.f32 %v13, %v15
    %vm18 = vcmask 253952
    %v19 = vsel %vm18, %v17, 0.0
    %20 = vadd.xlane.f32.xlu0 %v19
    %v21 = vpop.xlane.xlu0 %20
    %v22 = vrot.slane %v21, 4
    %v23 = vadd.f32 %v21, %v22
    %v24 = vrot.slane %v23, 2
    %v25 = vadd.f32 %v23, %v24
    %v26 = vrot.slane %v25, 1
    %v27 = vadd.f32 %v25, %v26
    %s28 = vtos %v27
    %v29 = vrot.slane %v13, 1
    %v31 = vmul.f32 %v13, %v29
    %v33 = vrot.slane %v31, 1
    %v35 = vsel %vm18, %v33, 0.0
    %36 = vadd.xlane.f32.xlu0 %v35
    %v37 = vpop.xlane.xlu0 %36
    %v38 = vrot.slane %v37, 4
    %v39 = vadd.f32 %v37, %v38
    %v40 = vrot.slane %v39, 2
    %v41 = vadd.f32 %v39, %v40
    %v42 = vrot.slane %v41, 1
    %v43 = vadd.f32 %v41, %v42
    %s44 = vtos %v43
    %s45 = scalar_lea.smem [#allocation3], 0
    %46 = sst [smem:[%s45]] %s28
    %s47 = sld [smem:[#allocation2]]
    %s48 = sadd.f32 %s44, %s47
    %s49 = scalar_lea.smem [#allocation3], 1
    %50 = sst [smem:[%s49]] %s48
    // Predicated region
    $region10: #{_collapse_params.1} parent=1 // pred_check
      _
    $region11: #{_collapse_params.1} parent=1 // pred_check_branch
      %52 = sbr.rel (0) target = $region13
    $region12: #{_collapse_params.1} parent=1 // pred_region
      %s54 = ssub.s32 16, 16
      %55 = vsyncadd [#allocation4], %s54
      %58 = dma.smem_to_hbm [#allocation3], 16, %s2, [#allocation4]
    $region13: #{_collapse_params.1} parent=1 // pred_fallthru
      _
    // Predicated region
    $region14: #{_collapse_params.1} parent=1 // pred_check
      _
    $region15: #{_collapse_params.1} parent=1 // pred_check_branch
      %60 = sbr.rel (0) target = $region17
    $region16: #{_collapse_params.1} parent=1 // pred_region
      %61 = dma.done [#allocation4], 16
    $region17: #{_collapse_params.1} parent=1 // pred_fallthru
      _
    %62 = sfence
    %63 = vsyncpa [#allocation4], 1

</llo_original>
